<compile_context>
chip_gen: v6e
topology: v6e:2x2x1
jax: 0.10.0
libtpu: 0.0.40
codegen_flags: <defaults>
</compile_context>

<pallas_src>
import jax
import jax.numpy as jnp
from jax import lax
from jax.experimental import pallas as pl
from jax.experimental.pallas import tpu as pltpu

# ---- problem sizes (consistent with the PyTorch module) ----
B = 2          # batch
T = 6          # num_tokens == context_length (matches the 6-row `inputs` tensor)
D_IN = 3       # d_in
D_OUT = 2      # d_out
NUM_HEADS = 2
HEAD_DIM = D_OUT // NUM_HEADS
DROPOUT = 0.0  # eval-mode identity (p = 0.0)


def _mha_kernel(x_ref, xT_ref, wq_ref, wkvT_ref, wo_ref, bo_ref, o_ref):
    # x_ref:    (B*T, D_IN)     tokens on sublanes (Q path)
    # xT_ref:   (D_IN, B*T)     tokens on lanes    (pre-transposed K/V path)
    # wq_ref:   (D_IN, D_OUT)   query weight, softmax scale pre-folded
    # wkvT_ref: (2*D_OUT, D_IN) rows = [Wk^T ; Wv^T]
    # wo_ref:   (D_OUT, D_OUT)  output projection (x @ W layout), rows grouped per head
    # bo_ref:   (1, D_OUT)      output projection bias
    # o_ref:    (B, T, D_OUT)
    bsz, t, d_out = o_ref.shape
    nh = NUM_HEADS
    hd = d_out // nh

    # --- projections: two well-shaped 2-D MXU matmuls (no G-batched tiny matmuls) ---
    q_all = jnp.dot(x_ref[...], wq_ref[...],
                    preferred_element_type=jnp.float32)            # (B*T, D_OUT)  tokens x feat
    kvT = jnp.dot(wkvT_ref[...], xT_ref[...],
                  preferred_element_type=jnp.float32)              # (2*D_OUT, B*T) feat x tokens
    kT_all = kvT[0:d_out, :]                                       # (D_OUT, B*T)
    vT_all = kvT[d_out:2 * d_out, :]                               # (D_OUT, B*T)

    wo = wo_ref[...]                                               # (D_OUT, D_OUT)
    bias = bo_ref[...]                                             # (1, D_OUT)

    # Additive causal mask, built once.  Finite min instead of -inf: padding-safe,
    # exp(-1e30 - m) underflows to exactly 0, so softmax matches the -inf reference.
    row = lax.broadcasted_iota(jnp.int32, (t, t), 0)
    col = lax.broadcasted_iota(jnp.int32, (t, t), 1)
    causal_bias = jnp.where(col > row, jnp.float32(-1e30), jnp.float32(0.0))   # (T, T)

    # --- per-(batch, head) attention: fully unrolled static loops (B*H tiny groups).
    #     All VPU/XLU work; HEAD_DIM-sized contractions stay off the MXU. ---
    for b in range(bsz):
        r0 = b * t
        out_b = jnp.zeros((t, d_out), jnp.float32) + bias          # start from out_proj bias
        for head in range(nh):
            c0 = head * hd
            q_bh = q_all[r0:r0 + t, c0:c0 + hd]                    # (T, HD)  tokens on sublanes
            kT_bh = kT_all[c0:c0 + hd, r0:r0 + t]                  # (HD, T)  tokens on lanes
            vT_bh = vT_all[c0:c0 + hd, r0:r0 + t]                  # (HD, T)

            # Scores: rank-HD outer-product accumulation on the VPU (HD == 1 here).
            s = causal_bias
            for d in range(hd):
                s = s + q_bh[:, d:d + 1] * kT_bh[d:d + 1, :]       # (T,1)*(1,T) -> (T,T)

            # Numerically stable softmax stats; normalization deferred until after PV.
            m = jnp.max(s, axis=-1, keepdims=True)                 # (T, 1)
            p = jnp.exp(s - m)                                     # (T, T)
            l = jnp.sum(p, axis=-1, keepdims=True)                 # (T, 1)
            inv_l = pl.reciprocal(l, approx=True)                  # EUP vrcp (otherwise idle)

            # TODO(synk): dropout on attention weights omitted — module uses p=0.0
            # (eval-mode identity), so no RNG is applied in-kernel.

            # Unnormalized PV (VPU mul + lane reduce), then fold out_proj by linearity:
            #   ctx @ Wo == sum_{head, d} ctx[:, head*HD + d] (outer) Wo[head*HD + d, :]
            for d in range(hd):
                ctx_d = jnp.sum(p * vT_bh[d:d + 1, :], axis=-1, keepdims=True) * inv_l   # (T, 1)
                out_b = out_b + ctx_d * wo[c0 + d:c0 + d + 1, :]                          # (T, D_OUT)

        o_ref[b, :, :] = out_b.astype(o_ref.dtype)


def multi_head_attention(x, wq, wk, wv, wo, bo):
    """x: (B, T, D_IN); wq/wk/wv: (D_IN, D_OUT) (x @ W layout); wo: (D_OUT, D_OUT); bo: (1, D_OUT)."""
    b, t, d_in = x.shape
    d_out = wq.shape[1]
    scale = 1.0 / (float(d_out // NUM_HEADS) ** 0.5)

    # Trace-time prep (tiny XLA ops; no per-(batch,head) replication of anything):
    x2d = x.reshape(b * t, d_in)                        # tokens on sublanes (Q path)
    xT = jnp.transpose(x2d)                             # (D_IN, B*T): tokens on lanes (K/V path)
    wq_s = wq * scale                                   # fold softmax scale into Wq
    wkvT = jnp.concatenate([wk.T, wv.T], axis=0)        # (2*D_OUT, D_IN): yields K^T / V^T directly

    vmem = pl.BlockSpec(memory_space=pltpu.MemorySpace.VMEM)
    return pl.pallas_call(
        _mha_kernel,
        out_shape=jax.ShapeDtypeStruct((b, t, d_out), jnp.float32),
        in_specs=[vmem] * 6,          # grid-less: whole arrays resident in VMEM
        out_specs=vmem,
    )(x2d, xT, wq_s, wkvT, wo, bo)


def _reference(x, wq, wk, wv, wo, bo):
    # pure-JAX reference mirroring the PyTorch forward
    b, t, _ = x.shape
    q = x @ wq
    k = x @ wk
    v = x @ wv
    q = q.reshape(b, t, NUM_HEADS, HEAD_DIM).transpose(0, 2, 1, 3)
    k = k.reshape(b, t, NUM_HEADS, HEAD_DIM).transpose(0, 2, 1, 3)
    v = v.reshape(b, t, NUM_HEADS, HEAD_DIM).transpose(0, 2, 1, 3)
    s = jnp.einsum("bhqd,bhkd->bhqk", q, k)
    mask = jnp.triu(jnp.ones((t, t), dtype=bool), k=1)
    s = jnp.where(mask[None, None], -jnp.inf, s)
    w = jax.nn.softmax(s / (HEAD_DIM ** 0.5), axis=-1)
    ctx = jnp.einsum("bhqk,bhkd->bhqd", w, v).transpose(0, 2, 1, 3).reshape(b, t, D_OUT)
    return ctx @ wo + bo


if __name__ == "__main__":
    key = jax.random.PRNGKey(0)
    kq, kk, kv, ko, kb = jax.random.split(key, 5)

    # deterministic inputs: the module's literal `inputs` tensor, stacked into a batch of 2
    inputs = jnp.array([[0.43, 0.15, 0.89],
                        [0.55, 0.87, 0.66],
                        [0.57, 0.85, 0.64],
                        [0.22, 0.58, 0.33],
                        [0.77, 0.25, 0.10],
                        [0.05, 0.80, 0.55]], dtype=jnp.float32)
    x = jnp.stack([inputs, inputs], axis=0)                                # (B, T, D_IN)

    # deterministic synthetic parameters (already transposed to (in, out) layout)
    wq = jax.random.normal(kq, (D_IN, D_OUT), dtype=jnp.float32) * 0.5     # W_query^T
    wk = jax.random.normal(kk, (D_IN, D_OUT), dtype=jnp.float32) * 0.5     # W_key^T
    wv = jax.random.normal(kv, (D_IN, D_OUT), dtype=jnp.float32) * 0.5     # W_value^T
    wo = jax.random.normal(ko, (D_OUT, D_OUT), dtype=jnp.float32) * 0.5    # out_proj.weight^T
    bo = (jax.random.normal(kb, (1, D_OUT), dtype=jnp.float32) * 0.1)      # out_proj.bias

    out = multi_head_attention(x, wq, wk, wv, wo, bo)
    out = jax.block_until_ready(out)

    ref = _reference(x, wq, wk, wv, wo, bo)
    assert out.shape == (B, T, D_OUT)
    assert bool(jnp.all(jnp.isfinite(out)))
    # Tolerance accounts for the approximate EUP reciprocal used for softmax normalization.
    assert jnp.allclose(out, ref, atol=1e-2, rtol=1e-2), "mismatch vs reference"

    print("KERNEL_OK")
</pallas_src>

<mosaic_0001>
module attributes {stable_mosaic.version = 11 : i64} {
  func.func @_mha_kernel(%arg0: memref<12x3xf32, #tpu.memory_space<vmem>>, %arg1: memref<3x12xf32, #tpu.memory_space<vmem>>, %arg2: memref<3x2xf32, #tpu.memory_space<vmem>>, %arg3: memref<4x3xf32, #tpu.memory_space<vmem>>, %arg4: memref<2x2xf32, #tpu.memory_space<vmem>>, %arg5: memref<1x2xf32, #tpu.memory_space<vmem>>, %arg6: memref<2x6x2xf32, #tpu.memory_space<vmem>>) attributes {dimension_semantics = [], scalar_prefetch = 0 : i64, scratch_operands = 0 : i64, tpu.core_type = #tpu.core_type<tc>} {
    %c0 = arith.constant 0 : index
    %c0_0 = arith.constant 0 : index
    %0 = vector.load %arg0[%c0, %c0_0] : memref<12x3xf32, #tpu.memory_space<vmem>>, vector<12x3xf32>
    %c0_1 = arith.constant 0 : index
    %c0_2 = arith.constant 0 : index
    %1 = vector.load %arg2[%c0_1, %c0_2] : memref<3x2xf32, #tpu.memory_space<vmem>>, vector<3x2xf32>
    %cst = arith.constant dense<0.000000e+00> : vector<12x2xf32>
    %2 = tpu.matmul %0, %1, %cst {dimension_numbers = #tpu.dot_dimension_numbers<[1], [0], [0], [1], [0, 0, 1, 1], [], []>} : vector<12x3xf32>, vector<3x2xf32>, vector<12x2xf32> -> vector<12x2xf32>
    %c0_3 = arith.constant 0 : index
    %c0_4 = arith.constant 0 : index
    %3 = vector.load %arg3[%c0_3, %c0_4] : memref<4x3xf32, #tpu.memory_space<vmem>>, vector<4x3xf32>
    %c0_5 = arith.constant 0 : index
    %c0_6 = arith.constant 0 : index
    %4 = vector.load %arg1[%c0_5, %c0_6] : memref<3x12xf32, #tpu.memory_space<vmem>>, vector<3x12xf32>
    %cst_7 = arith.constant dense<0.000000e+00> : vector<4x12xf32>
    %5 = tpu.matmul %3, %4, %cst_7 {dimension_numbers = #tpu.dot_dimension_numbers<[1], [0], [0], [1], [0, 0, 1, 1], [], []>} : vector<4x3xf32>, vector<3x12xf32>, vector<4x12xf32> -> vector<4x12xf32>
    %6 = vector.extract_strided_slice %5 {offsets = [0, 0], sizes = [2, 12], strides = [1, 1]} : vector<4x12xf32> to vector<2x12xf32>
    %7 = vector.extract_strided_slice %5 {offsets = [2, 0], sizes = [2, 12], strides = [1, 1]} : vector<4x12xf32> to vector<2x12xf32>
    %c0_8 = arith.constant 0 : index
    %c0_9 = arith.constant 0 : index
    %8 = vector.load %arg4[%c0_8, %c0_9] : memref<2x2xf32, #tpu.memory_space<vmem>>, vector<2x2xf32>
    %c0_10 = arith.constant 0 : index
    %c0_11 = arith.constant 0 : index
    %9 = vector.load %arg5[%c0_10, %c0_11] : memref<1x2xf32, #tpu.memory_space<vmem>>, vector<1x2xf32>
    %10 = tpu.iota {dimensions = array<i32: 0>} : vector<6x6xi32>
    %11 = tpu.iota {dimensions = array<i32: 1>} : vector<6x6xi32>
    %12 = arith.cmpi sgt, %11, %10 : vector<6x6xi32>
    %cst_12 = arith.constant -1.000000e+30 : f32
    %cst_13 = arith.constant 0.000000e+00 : f32
    %13 = vector.broadcast %cst_12 : f32 to vector<6x6xf32>
    %14 = vector.broadcast %cst_13 : f32 to vector<6x6xf32>
    %15 = arith.select %12, %13, %14 : vector<6x6xi1>, vector<6x6xf32>
    %cst_14 = arith.constant 0.000000e+00 : f32
    %16 = vector.broadcast %cst_14 : f32 to vector<6x2xf32>
    %17 = vector.broadcast %9 : vector<1x2xf32> to vector<6x2xf32>
    %18 = arith.addf %16, %17 : vector<6x2xf32>
    %19 = vector.extract_strided_slice %2 {offsets = [0, 0], sizes = [6, 1], strides = [1, 1]} : vector<12x2xf32> to vector<6x1xf32>
    %20 = vector.extract_strided_slice %6 {offsets = [0, 0], sizes = [1, 6], strides = [1, 1]} : vector<2x12xf32> to vector<1x6xf32>
    %21 = vector.extract_strided_slice %7 {offsets = [0, 0], sizes = [1, 6], strides = [1, 1]} : vector<2x12xf32> to vector<1x6xf32>
    %22 = vector.broadcast %19 : vector<6x1xf32> to vector<6x6xf32>
    %23 = vector.broadcast %20 : vector<1x6xf32> to vector<6x6xf32>
    %24 = arith.mulf %22, %23 : vector<6x6xf32>
    %25 = arith.addf %15, %24 : vector<6x6xf32>
    %cst_15 = arith.constant dense<0xFF800000> : vector<6xf32>
    %26 = vector.multi_reduction <maximumf>, %25, %cst_15 [1] : vector<6x6xf32> to vector<6xf32>
    %27 = vector.shape_cast %26 : vector<6xf32> to vector<6x1xf32>
    %28 = vector.broadcast %27 : vector<6x1xf32> to vector<6x6xf32>
    %29 = arith.subf %25, %28 : vector<6x6xf32>
    %30 = math.exp %29 : vector<6x6xf32>
    %cst_16 = arith.constant dense<0.000000e+00> : vector<6xf32>
    %31 = vector.multi_reduction <add>, %30, %cst_16 [1] : vector<6x6xf32> to vector<6xf32>
    %32 = vector.shape_cast %31 : vector<6xf32> to vector<6x1xf32>
    %33 = tpu.reciprocal %32 {approx = true} : vector<6x1xf32> -> vector<6x1xf32>
    %34 = vector.broadcast %21 : vector<1x6xf32> to vector<6x6xf32>
    %35 = arith.mulf %30, %34 : vector<6x6xf32>
    %cst_17 = arith.constant dense<0.000000e+00> : vector<6xf32>
    %36 = vector.multi_reduction <add>, %35, %cst_17 [1] : vector<6x6xf32> to vector<6xf32>
    %37 = vector.shape_cast %36 : vector<6xf32> to vector<6x1xf32>
    %38 = arith.mulf %37, %33 : vector<6x1xf32>
    %39 = vector.extract_strided_slice %8 {offsets = [0, 0], sizes = [1, 2], strides = [1, 1]} : vector<2x2xf32> to vector<1x2xf32>
    %40 = vector.broadcast %38 : vector<6x1xf32> to vector<6x2xf32>
    %41 = vector.broadcast %39 : vector<1x2xf32> to vector<6x2xf32>
    %42 = arith.mulf %40, %41 : vector<6x2xf32>
    %43 = arith.addf %18, %42 : vector<6x2xf32>
    %44 = vector.extract_strided_slice %2 {offsets = [0, 1], sizes = [6, 1], strides = [1, 1]} : vector<12x2xf32> to vector<6x1xf32>
    %45 = vector.extract_strided_slice %6 {offsets = [1, 0], sizes = [1, 6], strides = [1, 1]} : vector<2x12xf32> to vector<1x6xf32>
    %46 = vector.extract_strided_slice %7 {offsets = [1, 0], sizes = [1, 6], strides = [1, 1]} : vector<2x12xf32> to vector<1x6xf32>
    %47 = vector.broadcast %44 : vector<6x1xf32> to vector<6x6xf32>
    %48 = vector.broadcast %45 : vector<1x6xf32> to vector<6x6xf32>
    %49 = arith.mulf %47, %48 : vector<6x6xf32>
    %50 = arith.addf %15, %49 : vector<6x6xf32>
    %cst_18 = arith.constant dense<0xFF800000> : vector<6xf32>
    %51 = vector.multi_reduction <maximumf>, %50, %cst_18 [1] : vector<6x6xf32> to vector<6xf32>
    %52 = vector.shape_cast %51 : vector<6xf32> to vector<6x1xf32>
    %53 = vector.broadcast %52 : vector<6x1xf32> to vector<6x6xf32>
    %54 = arith.subf %50, %53 : vector<6x6xf32>
    %55 = math.exp %54 : vector<6x6xf32>
    %cst_19 = arith.constant dense<0.000000e+00> : vector<6xf32>
    %56 = vector.multi_reduction <add>, %55, %cst_19 [1] : vector<6x6xf32> to vector<6xf32>
    %57 = vector.shape_cast %56 : vector<6xf32> to vector<6x1xf32>
    %58 = tpu.reciprocal %57 {approx = true} : vector<6x1xf32> -> vector<6x1xf32>
    %59 = vector.broadcast %46 : vector<1x6xf32> to vector<6x6xf32>
    %60 = arith.mulf %55, %59 : vector<6x6xf32>
    %cst_20 = arith.constant dense<0.000000e+00> : vector<6xf32>
    %61 = vector.multi_reduction <add>, %60, %cst_20 [1] : vector<6x6xf32> to vector<6xf32>
    %62 = vector.shape_cast %61 : vector<6xf32> to vector<6x1xf32>
    %63 = arith.mulf %62, %58 : vector<6x1xf32>
    %64 = vector.extract_strided_slice %8 {offsets = [1, 0], sizes = [1, 2], strides = [1, 1]} : vector<2x2xf32> to vector<1x2xf32>
    %65 = vector.broadcast %63 : vector<6x1xf32> to vector<6x2xf32>
    %66 = vector.broadcast %64 : vector<1x2xf32> to vector<6x2xf32>
    %67 = arith.mulf %65, %66 : vector<6x2xf32>
    %68 = arith.addf %43, %67 : vector<6x2xf32>
    %c0_21 = arith.constant 0 : index
    %c0_22 = arith.constant 0 : index
    %c0_23 = arith.constant 0 : index
    %69 = vector.load %arg6[%c0_21, %c0_22, %c0_23] : memref<2x6x2xf32, #tpu.memory_space<vmem>>, vector<1x6x2xf32>
    %70 = vector.shape_cast %69 : vector<1x6x2xf32> to vector<6x2xf32>
    %71 = vector.shape_cast %68 : vector<6x2xf32> to vector<1x6x2xf32>
    tpu.vector_store %arg6[%c0_21, %c0_22, %c0_23], %71 {strides = array<i32>} : memref<2x6x2xf32, #tpu.memory_space<vmem>>, vector<1x6x2xf32>,
    %cst_24 = arith.constant 0.000000e+00 : f32
    %72 = vector.broadcast %cst_24 : f32 to vector<6x2xf32>
    %73 = vector.broadcast %9 : vector<1x2xf32> to vector<6x2xf32>
    %74 = arith.addf %72, %73 : vector<6x2xf32>
    %75 = vector.extract_strided_slice %2 {offsets = [6, 0], sizes = [6, 1], strides = [1, 1]} : vector<12x2xf32> to vector<6x1xf32>
    %76 = vector.extract_strided_slice %6 {offsets = [0, 6], sizes = [1, 6], strides = [1, 1]} : vector<2x12xf32> to vector<1x6xf32>
    %77 = vector.extract_strided_slice %7 {offsets = [0, 6], sizes = [1, 6], strides = [1, 1]} : vector<2x12xf32> to vector<1x6xf32>
    %78 = vector.broadcast %75 : vector<6x1xf32> to vector<6x6xf32>
    %79 = vector.broadcast %76 : vector<1x6xf32> to vector<6x6xf32>
    %80 = arith.mulf %78, %79 : vector<6x6xf32>
    %81 = arith.addf %15, %80 : vector<6x6xf32>
    %cst_25 = arith.constant dense<0xFF800000> : vector<6xf32>
    %82 = vector.multi_reduction <maximumf>, %81, %cst_25 [1] : vector<6x6xf32> to vector<6xf32>
    %83 = vector.shape_cast %82 : vector<6xf32> to vector<6x1xf32>
    %84 = vector.broadcast %83 : vector<6x1xf32> to vector<6x6xf32>
    %85 = arith.subf %81, %84 : vector<6x6xf32>
    %86 = math.exp %85 : vector<6x6xf32>
    %cst_26 = arith.constant dense<0.000000e+00> : vector<6xf32>
    %87 = vector.multi_reduction <add>, %86, %cst_26 [1] : vector<6x6xf32> to vector<6xf32>
    %88 = vector.shape_cast %87 : vector<6xf32> to vector<6x1xf32>
    %89 = tpu.reciprocal %88 {approx = true} : vector<6x1xf32> -> vector<6x1xf32>
    %90 = vector.broadcast %77 : vector<1x6xf32> to vector<6x6xf32>
    %91 = arith.mulf %86, %90 : vector<6x6xf32>
    %cst_27 = arith.constant dense<0.000000e+00> : vector<6xf32>
    %92 = vector.multi_reduction <add>, %91, %cst_27 [1] : vector<6x6xf32> to vector<6xf32>
    %93 = vector.shape_cast %92 : vector<6xf32> to vector<6x1xf32>
    %94 = arith.mulf %93, %89 : vector<6x1xf32>
    %95 = vector.extract_strided_slice %8 {offsets = [0, 0], sizes = [1, 2], strides = [1, 1]} : vector<2x2xf32> to vector<1x2xf32>
    %96 = vector.broadcast %94 : vector<6x1xf32> to vector<6x2xf32>
    %97 = vector.broadcast %95 : vector<1x2xf32> to vector<6x2xf32>
    %98 = arith.mulf %96, %97 : vector<6x2xf32>
    %99 = arith.addf %74, %98 : vector<6x2xf32>
    %100 = vector.extract_strided_slice %2 {offsets = [6, 1], sizes = [6, 1], strides = [1, 1]} : vector<12x2xf32> to vector<6x1xf32>
    %101 = vector.extract_strided_slice %6 {offsets = [1, 6], sizes = [1, 6], strides = [1, 1]} : vector<2x12xf32> to vector<1x6xf32>
    %102 = vector.extract_strided_slice %7 {offsets = [1, 6], sizes = [1, 6], strides = [1, 1]} : vector<2x12xf32> to vector<1x6xf32>
    %103 = vector.broadcast %100 : vector<6x1xf32> to vector<6x6xf32>
    %104 = vector.broadcast %101 : vector<1x6xf32> to vector<6x6xf32>
    %105 = arith.mulf %103, %104 : vector<6x6xf32>
    %106 = arith.addf %15, %105 : vector<6x6xf32>
    %cst_28 = arith.constant dense<0xFF800000> : vector<6xf32>
    %107 = vector.multi_reduction <maximumf>, %106, %cst_28 [1] : vector<6x6xf32> to vector<6xf32>
    %108 = vector.shape_cast %107 : vector<6xf32> to vector<6x1xf32>
    %109 = vector.broadcast %108 : vector<6x1xf32> to vector<6x6xf32>
    %110 = arith.subf %106, %109 : vector<6x6xf32>
    %111 = math.exp %110 : vector<6x6xf32>
    %cst_29 = arith.constant dense<0.000000e+00> : vector<6xf32>
    %112 = vector.multi_reduction <add>, %111, %cst_29 [1] : vector<6x6xf32> to vector<6xf32>
    %113 = vector.shape_cast %112 : vector<6xf32> to vector<6x1xf32>
    %114 = tpu.reciprocal %113 {approx = true} : vector<6x1xf32> -> vector<6x1xf32>
    %115 = vector.broadcast %102 : vector<1x6xf32> to vector<6x6xf32>
    %116 = arith.mulf %111, %115 : vector<6x6xf32>
    %cst_30 = arith.constant dense<0.000000e+00> : vector<6xf32>
    %117 = vector.multi_reduction <add>, %116, %cst_30 [1] : vector<6x6xf32> to vector<6xf32>
    %118 = vector.shape_cast %117 : vector<6xf32> to vector<6x1xf32>
    %119 = arith.mulf %118, %114 : vector<6x1xf32>
    %120 = vector.extract_strided_slice %8 {offsets = [1, 0], sizes = [1, 2], strides = [1, 1]} : vector<2x2xf32> to vector<1x2xf32>
    %121 = vector.broadcast %119 : vector<6x1xf32> to vector<6x2xf32>
    %122 = vector.broadcast %120 : vector<1x2xf32> to vector<6x2xf32>
    %123 = arith.mulf %121, %122 : vector<6x2xf32>
    %124 = arith.addf %99, %123 : vector<6x2xf32>
    %c1 = arith.constant 1 : index
    %c0_31 = arith.constant 0 : index
    %c0_32 = arith.constant 0 : index
    %125 = vector.load %arg6[%c1, %c0_31, %c0_32] : memref<2x6x2xf32, #tpu.memory_space<vmem>>, vector<1x6x2xf32>
    %126 = vector.shape_cast %125 : vector<1x6x2xf32> to vector<6x2xf32>
    %127 = vector.shape_cast %124 : vector<6x2xf32> to vector<1x6x2xf32>
    tpu.vector_store %arg6[%c1, %c0_31, %c0_32], %127 {strides = array<i32>} : memref<2x6x2xf32, #tpu.memory_space<vmem>>, vector<1x6x2xf32>,
    return
  }
}

</mosaic_0001>

<llo_original>
// kernel: tpu_custom_call.1
$region0: #{tpu_custom_call.1}
  #allocation0 [shape = 'u32[]', space=smem, size = 0x4, offset = 0x4, fixed_abs, tag = 'smem constant byte address 0x4 - core index']
  #allocation1 [shape = 'u32[144,128]{1,0:T(1,128)}', space=vmem, size = 0x12000, scoped, tag = 'internal scratch']
  %s0 = inlined_call_operand.vmem [shape: f32[12,3], index: 0, kind: input, shape index: {}]
  %s1 = inlined_call_operand.vmem [shape: f32[3,12], index: 1, kind: input, shape index: {}]
  %s2 = inlined_call_operand.vmem [shape: f32[3,2], index: 2, kind: input, shape index: {}]
  %s3 = inlined_call_operand.vmem [shape: f32[4,3], index: 3, kind: input, shape index: {}]
  %s4 = inlined_call_operand.vmem [shape: f32[2,2], index: 4, kind: input, shape index: {}]
  %s5 = inlined_call_operand.vmem [shape: f32[1,2], index: 5, kind: input, shape index: {}]
  %s6 = inlined_call_operand.vmem [shape: f32[2,6,2], index: 6, kind: output, shape index: {}]
  %s7 = sld [smem:[#allocation0]]
  $region34: #{tpu_custom_call.1} parent=0
    _
  %s9 = ssub.s32 1, %s7
  %s10 = scalar_select 0, %s9, %s7
  // Predicated region
  $region2: #{tpu_custom_call.1} parent=0 // pred_check
    _
  $region3: #{tpu_custom_call.1} parent=0 // pred_check_branch
    %12 = sbr.rel (0) target = $region5
  $region4: #{tpu_custom_call.1} parent=0 // pred_region
    _
  $region5: #{tpu_custom_call.1} parent=0 // pred_fallthru
    _
  // Predicated region
  $region6: #{tpu_custom_call.1} parent=0 // pred_check
    _
  $region7: #{tpu_custom_call.1} parent=0 // pred_check_branch
    %14 = sbr.rel (0) target = $region9
  $region8: #{tpu_custom_call.1} parent=0 // pred_region
    _
  $region9: #{tpu_custom_call.1} parent=0 // pred_fallthru
    _
  // Predicated region
  $region10: #{tpu_custom_call.1} parent=0 // pred_check
    _
  $region11: #{tpu_custom_call.1} parent=0 // pred_check_branch
    %16 = sbr.rel (0) target = $region13
  $region12: #{tpu_custom_call.1} parent=0 // pred_region
    _
  $region13: #{tpu_custom_call.1} parent=0 // pred_fallthru
    _
  // Predicated region
  $region14: #{tpu_custom_call.1} parent=0 // pred_check
    _
  $region15: #{tpu_custom_call.1} parent=0 // pred_check_branch
    %18 = sbr.rel (0) target = $region17
  $region16: #{tpu_custom_call.1} parent=0 // pred_region
    _
  $region17: #{tpu_custom_call.1} parent=0 // pred_fallthru
    _
  // Predicated region
  $region18: #{tpu_custom_call.1} parent=0 // pred_check
    _
  $region19: #{tpu_custom_call.1} parent=0 // pred_check_branch
    %20 = sbr.rel (0) target = $region21
  $region20: #{tpu_custom_call.1} parent=0 // pred_region
    _
  $region21: #{tpu_custom_call.1} parent=0 // pred_fallthru
    _
  // Predicated region
  $region22: #{tpu_custom_call.1} parent=0 // pred_check
    _
  $region23: #{tpu_custom_call.1} parent=0 // pred_check_branch
    %22 = sbr.rel (0) target = $region25
  $region24: #{tpu_custom_call.1} parent=0 // pred_region
    _
  $region25: #{tpu_custom_call.1} parent=0 // pred_fallthru
    _
  %v23 = vld [vmem:[%s0] sm:$0xff]
  %v24 = vld [vmem:[%s0 + $0x8] sm:$0xf]
  %v25 = vld [vmem:[%s2] sm:$0x7]
  %vm26 = vcmask 23552
  %v28 = vsel %vm26, %v23, 0
  %v31 = vsel %vm26, %v24, 0
  %vm33 = vcmask 1042432
  %v35 = vsel %vm33, %v25, 0
  %37 = vmatprep.subr.mxu0 0.0
  %38 = vmatpush1.msra.mxu0 0.0
  %39 = vmatprep.subr.mxu0 0.0
  %40 = vmatpush1.msra.mxu0 0.0
  %41 = vmatprep.subr.mxu0 0.0
  %42 = vmatpush1.msra.mxu0 0.0
  %43 = vmatprep.subr.mxu0 0.0
  %44 = vmatpush1.msra.mxu0 0.0
  %45 = vmatprep.subr.mxu0 0.0
  %46 = vmatpush1.msra.mxu0 0.0
  %47 = vmatprep.subr.mxu0 0.0
  %48 = vmatpush1.msra.mxu0 0.0
  %49 = vmatprep.subr.mxu0 0.0
  %50 = vmatpush1.msra.mxu0 0.0
  %51 = vmatprep.subr.mxu0 0.0
  %52 = vmatpush1.msra.mxu0 0.0
  %53 = vmatprep.subr.mxu0 0.0
  %54 = vmatpush1.msra.mxu0 0.0
  %55 = vmatprep.subr.mxu0 0.0
  %56 = vmatpush1.msra.mxu0 0.0
  %57 = vmatprep.subr.mxu0 0.0
  %58 = vmatpush1.msra.mxu0 0.0
  %59 = vmatprep.subr.mxu0 0.0
  %60 = vmatpush1.msra.mxu0 0.0
  %61 = vmatprep.subr.mxu0 0.0
  %62 = vmatpush1.msra.mxu0 0.0
  %63 = vmatprep.subr.mxu0 0.0
  %64 = vmatpush1.msra.mxu0 0.0
  %65 = vmatprep.subr.mxu0 0.0
  %66 = vmatpush1.msra.mxu0 0.0
  %67 = vmatprep.subr.mxu0 0.0
  %68 = vmatpush1.msra.mxu0 %v35
  %69 = vmatprep.subr.mxu0 0.0
  %70 = vmatpush2.msra.mxu0 0.0
  %71 = vmatprep.subr.mxu0 0.0
  %72 = vmatpush2.msra.mxu0 0.0
  %73 = vmatprep.subr.mxu0 0.0
  %74 = vmatpush2.msra.mxu0 0.0
  %75 = vmatprep.subr.mxu0 0.0
  %76 = vmatpush2.msra.mxu0 0.0
  %77 = vmatprep.subr.mxu0 0.0
  %78 = vmatpush2.msra.mxu0 0.0
  %79 = vmatprep.subr.mxu0 0.0
  %80 = vmatpush2.msra.mxu0 0.0
  %81 = vmatprep.subr.mxu0 0.0
  %82 = vmatpush2.msra.mxu0 0.0
  %83 = vmatprep.subr.mxu0 0.0
  %84 = vmatpush2.msra.mxu0 0.0
  %85 = vmatprep.subr.mxu0 0.0
  %86 = vmatpush2.msra.mxu0 0.0
  %87 = vmatprep.subr.mxu0 0.0
  %88 = vmatpush2.msra.mxu0 0.0
  %89 = vmatprep.subr.mxu0 0.0
  %90 = vmatpush2.msra.mxu0 0.0
  %91 = vmatprep.subr.mxu0 0.0
  %92 = vmatpush2.msra.mxu0 0.0
  %93 = vmatprep.subr.mxu0 0.0
  %94 = vmatpush2.msra.mxu0 0.0
  %95 = vmatprep.subr.mxu0 0.0
  %96 = vmatpush2.msra.mxu0 0.0
  %97 = vmatprep.subr.mxu0 0.0
  %98 = vmatpush2.msra.mxu0 0.0
  %99 = vmatprep.subr.mxu0 0.0
  %100 = vmatpush2.msra.mxu0 0.0
  %101 = vmatprep.mubr.f32.mxu0 0.0
  %102 = vmatmul.mubr.f32.gmra.mxu0 %v28
  %v103 = vpop.f32.mrf.mxu0
  %v104 = vadd.f32 0.0, %v103
  %v105 = vpop.f32.mrf.mxu0
  %106 = vmatprep.mubr.f32.mxu0 0.0
  %107 = vmatmul.mubr.f32.gmra.mxu0 %v31
  %v108 = vpop.f32.mrf.mxu0
  %v109 = vadd.f32 0.0, %v108
  %v110 = vpop.f32.mrf.mxu0
  %111 = vdwg.mxu0
  %v112 = vld [vmem:[%s3] sm:$0xf]
  %v113 = vld [vmem:[%s1] sm:$0x7]
  %v115 = vsel %vm26, %v112, 0
  %v118 = vsel %vm33, %v113, 0
  %120 = vmatprep.subr.mxu0 0.0
  %121 = vmatpush1.msra.mxu0 0.0
  %122 = vmatprep.subr.mxu0 0.0
  %123 = vmatpush1.msra.mxu0 0.0
  %124 = vmatprep.subr.mxu0 0.0
  %125 = vmatpush1.msra.mxu0 0.0
  %126 = vmatprep.subr.mxu0 0.0
  %127 = vmatpush1.msra.mxu0 0.0
  %128 = vmatprep.subr.mxu0 0.0
  %129 = vmatpush1.msra.mxu0 0.0
  %130 = vmatprep.subr.mxu0 0.0
  %131 = vmatpush1.msra.mxu0 0.0
  %132 = vmatprep.subr.mxu0 0.0
  %133 = vmatpush1.msra.mxu0 0.0
  %134 = vmatprep.subr.mxu0 0.0
  %135 = vmatpush1.msra.mxu0 0.0
  %136 = vmatprep.subr.mxu0 0.0
  %137 = vmatpush1.msra.mxu0 0.0
  %138 = vmatprep.subr.mxu0 0.0
  %139 = vmatpush1.msra.mxu0 0.0
  %140 = vmatprep.subr.mxu0 0.0
  %141 = vmatpush1.msra.mxu0 0.0
  %142 = vmatprep.subr.mxu0 0.0
  %143 = vmatpush1.msra.mxu0 0.0
  %144 = vmatprep.subr.mxu0 0.0
  %145 = vmatpush1.msra.mxu0 0.0
  %146 = vmatprep.subr.mxu0 0.0
  %147 = vmatpush1.msra.mxu0 0.0
  %148 = vmatprep.subr.mxu0 0.0
  %149 = vmatpush1.msra.mxu0 0.0
  %150 = vmatprep.subr.mxu0 0.0
  %151 = vmatpush1.msra.mxu0 %v118
  %152 = vmatprep.subr.mxu0 0.0
  %153 = vmatpush2.msra.mxu0 0.0
  %154 = vmatprep.subr.mxu0 0.0
  %155 = vmatpush2.msra.mxu0 0.0
  %156 = vmatprep.subr.mxu0 0.0
  %157 = vmatpush2.msra.mxu0 0.0
  %158 = vmatprep.subr.mxu0 0.0
  %159 = vmatpush2.msra.mxu0 0.0
  %160 = vmatprep.subr.mxu0 0.0
  %161 = vmatpush2.msra.mxu0 0.0
  %162 = vmatprep.subr.mxu0 0.0
  %163 = vmatpush2.msra.mxu0 0.0
  %164 = vmatprep.subr.mxu0 0.0
  %165 = vmatpush2.msra.mxu0 0.0
  %166 = vmatprep.subr.mxu0 0.0
  %167 = vmatpush2.msra.mxu0 0.0
  %168 = vmatprep.subr.mxu0 0.0
  %169 = vmatpush2.msra.mxu0 0.0
  %170 = vmatprep.subr.mxu0 0.0
  %171 = vmatpush2.msra.mxu0 0.0
  %172 = vmatprep.subr.mxu0 0.0
  %173 = vmatpush2.msra.mxu0 0.0
  %174 = vmatprep.subr.mxu0 0.0
  %175 = vmatpush2.msra.mxu0 0.0
  %176 = vmatprep.subr.mxu0 0.0
  %177 = vmatpush2.msra.mxu0 0.0
  %178 = vmatprep.subr.mxu0 0.0
  %179 = vmatpush2.msra.mxu0 0.0
  %180 = vmatprep.subr.mxu0 0.0
  %181 = vmatpush2.msra.mxu0 0.0
  %182 = vmatprep.subr.mxu0 0.0
  %183 = vmatpush2.msra.mxu0 0.0
  %184 = vmatprep.mubr.f32.mxu0 0.0
  %185 = vmatmul.mubr.f32.gmra.mxu0 %v115
  %v186 = vpop.f32.mrf.mxu0
  %v187 = vadd.f32 0.0, %v186
  %v188 = vpop.f32.mrf.mxu0
  %189 = vdwg.mxu0
  %v190 = vld [vmem:[%s4] sm:$0x3]
  %v191 = vld [vmem:[%s5] sm:$0x1]
  %v192 = vlaneseq
  %v193 = vshrl.u32 %v192, 7
  %v194 = vlaneseq
  %v195 = vand.u32 %v194, 127
  %vm196 = vcmp.gt.s32.totalorder %v195, %v193
  %v197 = vsel %vm196, -1e+30, 0.0
  %v199 = vlaneseq
  %v200 = vshrl.u32 %v199, 7
  %v201 = vsub.s32 0, %v200
  %v202 = vrot.slane %v191, %v201
  %v204 = vadd.f32 %v202, 0.0
  %206 = vset.pattern.permute.xlu0 0
  %207 = vperm.xlu0 %206, %v104
  %v208 = vpop.permute.xlu0 %207
  %v210 = vlaneseq
  %v211 = vshrl.u32 %v210, 7
  %v212 = vsub.s32 0, %v211
  %v213 = vrot.slane %v187, %v212
  %v214 = vmul.f32 %v208, %v213
  %v215 = vadd.f32 %v197, %v214
  %vm216 = vcmask 46080
  %v217 = vsel %vm216, %v215, -inf
  %218 = vmax.xlane.f32.xlu0 %v217
  %v219 = vpop.xlane.xlu0 %218
  %v220 = vsub.f32 %v215, %v219
  %v221 = vmul.f32 %v220, 1.442695
  %v222 = vpow.pop %v221
  %v223 = vsel %vm216, %v222, 0.0
  %224 = vadd.xlane.f32.xlu0 %v223
  %v225 = vpop.xlane.xlu0 %224
  %v226 = vrcp.pop %v225
  %v227 = vlaneseq
  %v228 = vshrl.u32 %v227, 7
  %v229 = vsub.s32 2, %v228
  %v230 = vrot.slane %v187, %v229
  %v231 = vmul.f32 %v222, %v230
  %v232 = vsel %vm216, %v231, 0.0
  %233 = vadd.xlane.f32.xlu0 %v232
  %v234 = vpop.xlane.xlu0 %233
  %v235 = vmul.f32 %v234, %v226
  %v236 = vlaneseq
  %v237 = vshrl.u32 %v236, 7
  %v238 = vsub.s32 0, %v237
  %v239 = vrot.slane %v190, %v238
  %v240 = vmul.f32 %v235, %v239
  %v241 = vadd.f32 %v204, %v240
  %242 = vset.pattern.permute.xlu0 1
  %243 = vperm.xlu0 %242, %v104
  %v244 = vpop.permute.xlu0 %243
  %v246 = vlaneseq
  %v247 = vshrl.u32 %v246, 7
  %v248 = vsub.s32 1, %v247
  %v249 = vrot.slane %v187, %v248
  %v250 = vmul.f32 %v244, %v249
  %v251 = vadd.f32 %v197, %v250
  %v252 = vsel %vm216, %v251, -inf
  %253 = vmax.xlane.f32.xlu0 %v252
  %v254 = vpop.xlane.xlu0 %253
  %v255 = vsub.f32 %v251, %v254
  %v256 = vmul.f32 %v255, 1.442695
  %v257 = vpow.pop %v256
  %v258 = vsel %vm216, %v257, 0.0
  %259 = vadd.xlane.f32.xlu0 %v258
  %v260 = vpop.xlane.xlu0 %259
  %v261 = vrcp.pop %v260
  %v262 = vlaneseq
  %v263 = vshrl.u32 %v262, 7
  %v264 = vsub.s32 3, %v263
  %v265 = vrot.slane %v187, %v264
  %v266 = vmul.f32 %v257, %v265
  %v267 = vsel %vm216, %v266, 0.0
  %268 = vadd.xlane.f32.xlu0 %v267
  %v269 = vpop.xlane.xlu0 %268
  %v270 = vmul.f32 %v269, %v261
  %v271 = vlaneseq
  %v272 = vshrl.u32 %v271, 7
  %v273 = vsub.s32 1, %v272
  %v274 = vrot.slane %v190, %v273
  %v275 = vmul.f32 %v270, %v274
  %v276 = vadd.f32 %v241, %v275
  %vm277 = vcmask 13312
  %278 = vst.msk [vmem:[%s6] sm:$0x3f] %vm277, %v276
  %280 = vset.pattern.permute.xlu0 0
  %281 = vperm.xlu0 %280, %v109
  %v282 = vpop.permute.xlu0 %281
  %v284 = vmul.f32 %v282, %v213
  %vm287 = vcmask 1041408
  %v288 = vrot.slane %v214, 6
  %v289 = vrot.slane %v284, 6
  %v290 = vsel %vm287, %v288, %v289
  %291 = vrot.lane.b32.xlu0 %v290, 122
  %v292 = vpop.permute.xlu0 %291
  %v294 = vadd.f32 %v197, %v292
  %v295 = vsel %vm216, %v294, -inf
  %296 = vmax.xlane.f32.xlu0 %v295
  %v297 = vpop.xlane.xlu0 %296
  %v298 = vsub.f32 %v294, %v297
  %v299 = vmul.f32 %v298, 1.442695
  %v300 = vpow.pop %v299
  %v301 = vsel %vm216, %v300, 0.0
  %302 = vadd.xlane.f32.xlu0 %v301
  %v303 = vpop.xlane.xlu0 %302
  %v304 = vrcp.pop %v303
  %306 = vrot.lane.b32.xlu0 %v230, 122
  %v307 = vpop.permute.xlu0 %306
  %v309 = vmul.f32 %v300, %v307
  %v310 = vsel %vm216, %v309, 0.0
  %311 = vadd.xlane.f32.xlu0 %v310
  %v312 = vpop.xlane.xlu0 %311
  %v313 = vmul.f32 %v312, %v304
  %v314 = vmul.f32 %v313, %v239
  %v315 = vadd.f32 %v204, %v314
  %316 = vset.pattern.permute.xlu0 1
  %317 = vperm.xlu0 %316, %v109
  %v318 = vpop.permute.xlu0 %317
  %v320 = vmul.f32 %v318, %v249
  %v323 = vrot.slane %v250, 6
  %v324 = vrot.slane %v320, 6
  %v325 = vsel %vm287, %v323, %v324
  %326 = vrot.lane.b32.xlu0 %v325, 122
  %v327 = vpop.permute.xlu0 %326
  %v329 = vadd.f32 %v197, %v327
  %v330 = vsel %vm216, %v329, -inf
  %331 = vmax.xlane.f32.xlu0 %v330
  %v332 = vpop.xlane.xlu0 %331
  %v333 = vsub.f32 %v329, %v332
  %v334 = vmul.f32 %v333, 1.442695
  %v335 = vpow.pop %v334
  %v336 = vsel %vm216, %v335, 0.0
  %337 = vadd.xlane.f32.xlu0 %v336
  %v338 = vpop.xlane.xlu0 %337
  %v339 = vrcp.pop %v338
  %341 = vrot.lane.b32.xlu0 %v265, 122
  %v342 = vpop.permute.xlu0 %341
  %v344 = vmul.f32 %v335, %v342
  %v345 = vsel %vm216, %v344, 0.0
  %346 = vadd.xlane.f32.xlu0 %v345
  %v347 = vpop.xlane.xlu0 %346
  %v348 = vmul.f32 %v347, %v339
  %v349 = vmul.f32 %v348, %v274
  %v350 = vadd.f32 %v315, %v349
  %s351 = scalar_lea.vmem %s6, 8
  %352 = vst.msk [vmem:[%s351] sm:$0x3f] %vm277, %v350
  // Predicated region
  $region26: #{tpu_custom_call.1} parent=0 // pred_check
    _
  $region27: #{tpu_custom_call.1} parent=0 // pred_check_branch
    %354 = sbr.rel (0) target = $region29
  $region28: #{tpu_custom_call.1} parent=0 // pred_region
    _
  $region29: #{tpu_custom_call.1} parent=0 // pred_fallthru
    _
  // Predicated region
  $region30: #{tpu_custom_call.1} parent=0 // pred_check
    _
  $region31: #{tpu_custom_call.1} parent=0 // pred_check_branch
    %356 = sbr.rel (0) target = $region33
  $region32: #{tpu_custom_call.1} parent=0 // pred_region
    _
  $region33: #{tpu_custom_call.1} parent=0 // pred_fallthru
    _

</llo_original>
